<compile_context>
chip_gen: v7x
topology: tpu7x:2x2x1
jax: 0.10.0
libtpu: 0.0.40
codegen_flags: <defaults>
</compile_context>

<pallas_src>
import functools

import jax
import jax.numpy as jnp
from jax.experimental import pallas as pl
from jax.experimental.pallas import tpu as pltpu


def _cdiv(a, b):
    return -(-a // b)


def _choose_tile(dim, max_tile, granule):
    """Tile size (multiple of `granule`, ~<= max_tile) and padded dimension."""
    n_tiles = _cdiv(dim, max_tile)
    tile = _cdiv(_cdiv(dim, n_tiles), granule) * granule
    return tile, tile * n_tiles


def _bilinear_kernel(x_ref, w_ref, y_ref, o_ref, inter_ref):
    # x_ref:     (1, tm, D1)
    # w_ref:     (1, D1, D2)
    # y_ref:     (1, tn, D2)
    # o_ref:     (1, 1, tm, tn)
    # inter_ref: (tm, D2) f32 VMEM scratch, carried across the innermost
    #            (S2-tile) grid axis.
    @pl.when(pl.program_id(3) == 0)
    def _():
        # X_tile @ W depends only on (l, b, i): recompute once per S2 sweep.
        inter_ref[...] = jnp.dot(
            x_ref[0], w_ref[0], preferred_element_type=jnp.float32
        )

    # Contract over D2 directly (transposed contraction on the MXU); avoids
    # materializing y.T and the associated XLU relayout.
    final = jax.lax.dot_general(
        inter_ref[...],
        y_ref[0],
        dimension_numbers=(((1,), (1,)), ((), ())),
        preferred_element_type=jnp.float32,
    )
    o_ref[0, 0] = final.astype(o_ref.dtype)


@functools.partial(jax.jit, static_argnames=("use_input_biases",))
def bilinear_matrix_attention(matrix_1, matrix_2, weight, use_input_biases=False):
    """Pallas implementation of BilinearMatrixAttention.forward.

    matrix_1: (B, S1, D1) float32
    matrix_2: (B, S2, D2) float32
    weight:   (D1', D2') or (L, D1', D2') where D' = D + 1 if use_input_biases
    """
    if use_input_biases:
        ones1 = jnp.ones(matrix_1.shape[:-1] + (1,), matrix_1.dtype)
        ones2 = jnp.ones(matrix_2.shape[:-1] + (1,), matrix_2.dtype)
        matrix_1 = jnp.concatenate([matrix_1, ones1], axis=-1)
        matrix_2 = jnp.concatenate([matrix_2, ones2], axis=-1)

    if weight.ndim == 2:
        weight = weight[None]  # (1, D1, D2)
    L, D1, D2 = weight.shape
    B, S1, _ = matrix_1.shape
    _, S2, _ = matrix_2.shape

    # Tile S1 (sublane granule 8) and S2 (lane granule 128 -> lane-dense
    # output stores).  Caps keep the double-buffered working set small enough
    # for v7x's 32 MiB scoped VMEM even with D1/D2 ~ 1k.
    tm, S1p = _choose_tile(S1, 256, 8)
    tn, S2p = _choose_tile(S2, 512, 128)

    if S1p != S1:
        matrix_1 = jnp.pad(matrix_1, ((0, 0), (0, S1p - S1), (0, 0)))
    if S2p != S2:
        matrix_2 = jnp.pad(matrix_2, ((0, 0), (0, S2p - S2), (0, 0)))

    n_i = S1p // tm
    n_j = S2p // tn

    out = pl.pallas_call(
        _bilinear_kernel,
        out_shape=jax.ShapeDtypeStruct((B, L, S1p, S2p), matrix_1.dtype),
        grid_spec=pltpu.PrefetchScalarGridSpec(
            num_scalar_prefetch=0,
            # L outermost: W is re-DMA'd only when l changes (L fetches total,
            # not B*L).  The S2-tile axis is innermost so the staged
            # intermediate is reused across it.
            grid=(L, B, n_i, n_j),
            in_specs=[
                # X tile: invariant in l and j -> not re-DMA'd across them.
                pl.BlockSpec((1, tm, D1), lambda l, b, i, j: (b, i, 0)),
                # W: invariant in b, i, j.
                pl.BlockSpec((1, D1, D2), lambda l, b, i, j: (l, 0, 0)),
                # Y tile: streamed along the innermost axis.
                pl.BlockSpec((1, tn, D2), lambda l, b, i, j: (b, j, 0)),
            ],
            out_specs=pl.BlockSpec(
                (1, 1, tm, tn), lambda l, b, i, j: (b, l, i, j)
            ),
            scratch_shapes=[pltpu.VMEM((tm, D2), jnp.float32)],
        ),
        compiler_params=pltpu.CompilerParams(
            # j ("arbitrary") carries the staged intermediate; everything else
            # is independent and can be sharded across TensorCores.
            dimension_semantics=("parallel", "parallel", "parallel", "arbitrary"),
            vmem_limit_bytes=48 * 1024 * 1024,
        ),
    )(matrix_1, weight, matrix_2)

    out = out[:, :, :S1, :S2]           # drop S1/S2 padding
    if L == 1:
        out = out[:, 0]                 # matches torch final.squeeze(1)
    return out


def init_weight(key, matrix_1_dim, matrix_2_dim, use_input_biases=False, label_dim=1):
    """Deterministic xavier_uniform init matching the module's __init__ shapes."""
    d1 = matrix_1_dim + (1 if use_input_biases else 0)
    d2 = matrix_2_dim + (1 if use_input_biases else 0)
    bound = (6.0 / (d1 + d2)) ** 0.5
    if label_dim == 1:
        shape = (d1, d2)
    else:
        shape = (label_dim, d1, d2)
    w = jax.random.uniform(key, shape, jnp.float32, minval=-bound, maxval=bound)
    bias = jnp.zeros((1,), jnp.float32)  # declared in module, unused in forward
    return w, bias


if __name__ == "__main__":
    B, S1, S2, D1, D2 = 2, 8, 8, 32, 32
    key = jax.random.PRNGKey(0)
    k1, k2, kw, kw3, kwb = jax.random.split(key, 5)

    matrix_1 = jax.random.normal(k1, (B, S1, D1), jnp.float32)
    matrix_2 = jax.random.normal(k2, (B, S2, D2), jnp.float32)

    # --- label_dim == 1 (default attention use) ---
    weight, _bias = init_weight(kw, D1, D2)
    out = bilinear_matrix_attention(matrix_1, matrix_2, weight)
    out = jax.block_until_ready(out)
    ref = jnp.einsum("bsd,de,bte->bst", matrix_1, weight, matrix_2)
    assert out.shape == (B, S1, S2), out.shape
    assert jnp.allclose(out, ref, atol=1e-4, rtol=1e-4), "mismatch (label_dim=1)"

    # --- label_dim > 1 (nn.Bilinear-for-matrices use) ---
    w3, _ = init_weight(kw3, D1, D2, label_dim=3)
    out3 = bilinear_matrix_attention(matrix_1, matrix_2, w3)
    out3 = jax.block_until_ready(out3)
    ref3 = jnp.einsum("bsd,lde,bte->blst", matrix_1, w3, matrix_2)
    assert out3.shape == (B, 3, S1, S2), out3.shape
    assert jnp.allclose(out3, ref3, atol=1e-4, rtol=1e-4), "mismatch (label_dim=3)"

    # --- use_input_biases=True ---
    wb, _ = init_weight(kwb, D1, D2, use_input_biases=True)
    outb = bilinear_matrix_attention(matrix_1, matrix_2, wb, use_input_biases=True)
    outb = jax.block_until_ready(outb)
    m1b = jnp.concatenate([matrix_1, jnp.ones((B, S1, 1), jnp.float32)], axis=-1)
    m2b = jnp.concatenate([matrix_2, jnp.ones((B, S2, 1), jnp.float32)], axis=-1)
    refb = jnp.einsum("bsd,de,bte->bst", m1b, wb, m2b)
    assert outb.shape == (B, S1, S2), outb.shape
    assert jnp.allclose(outb, refb, atol=1e-4, rtol=1e-4), "mismatch (input biases)"

    print("KERNEL_OK")
</pallas_src>

<mosaic_0001>
module attributes {stable_mosaic.version = 11 : i64} {
  func.func @_bilinear_kernel(%arg0: i32, %arg1: i32, %arg2: i32, %arg3: i32, %arg4: memref<1x8x32xf32, #tpu.memory_space<vmem>>, %arg5: memref<1x32x32xf32, #tpu.memory_space<vmem>>, %arg6: memref<1x128x32xf32, #tpu.memory_space<vmem>>, %arg7: memref<1x1x8x128xf32, #tpu.memory_space<vmem>>, %arg8: memref<8x32xf32, #tpu.memory_space<vmem>>) attributes {dimension_semantics = [#tpu.dimension_semantics<parallel>, #tpu.dimension_semantics<parallel>, #tpu.dimension_semantics<parallel>, #tpu.dimension_semantics<arbitrary>], iteration_bounds = array<i64: 1, 2, 1, 1>, scalar_prefetch = 0 : i64, scratch_operands = 1 : i64, tpu.core_type = #tpu.core_type<tc>, window_params = [{transform_indices = @transform_0, window_bounds = array<i64: 1, 8, 32>}, {transform_indices = @transform_1, window_bounds = array<i64: 1, 32, 32>}, {transform_indices = @transform_2, window_bounds = array<i64: 1, 128, 32>}, {transform_indices = @transform_3, window_bounds = array<i64: 1, 1, 8, 128>}]} {
    %c0_i32 = arith.constant 0 : i32
    %0 = arith.cmpi eq, %arg3, %c0_i32 : i32
    %1 = arith.extui %0 : i1 to i32
    %c0_i32_0 = arith.constant 0 : i32
    %2 = arith.cmpi ne, %1, %c0_i32_0 : i32
    scf.if %2 {
      %c0_9 = arith.constant 0 : index
      %c0_10 = arith.constant 0 : index
      %c0_11 = arith.constant 0 : index
      %10 = vector.load %arg4[%c0_9, %c0_10, %c0_11] : memref<1x8x32xf32, #tpu.memory_space<vmem>>, vector<1x8x32xf32>
      %11 = vector.shape_cast %10 : vector<1x8x32xf32> to vector<8x32xf32>
      %c0_12 = arith.constant 0 : index
      %c0_13 = arith.constant 0 : index
      %c0_14 = arith.constant 0 : index
      %12 = vector.load %arg5[%c0_12, %c0_13, %c0_14] : memref<1x32x32xf32, #tpu.memory_space<vmem>>, vector<1x32x32xf32>
      %13 = vector.shape_cast %12 : vector<1x32x32xf32> to vector<32x32xf32>
      %cst_15 = arith.constant dense<0.000000e+00> : vector<8x32xf32>
      %14 = tpu.matmul %11, %13, %cst_15 {dimension_numbers = #tpu.dot_dimension_numbers<[1], [0], [0], [1], [0, 0, 1, 1], [], []>} : vector<8x32xf32>, vector<32x32xf32>, vector<8x32xf32> -> vector<8x32xf32>
      %c0_16 = arith.constant 0 : index
      %c0_17 = arith.constant 0 : index
      %15 = vector.load %arg8[%c0_16, %c0_17] : memref<8x32xf32, #tpu.memory_space<vmem>>, vector<8x32xf32>
      tpu.vector_store %arg8[%c0_16, %c0_17], %14 {strides = array<i32>} : memref<8x32xf32, #tpu.memory_space<vmem>>, vector<8x32xf32>,
    } else {
    }
    %c0 = arith.constant 0 : index
    %c0_1 = arith.constant 0 : index
    %3 = vector.load %arg8[%c0, %c0_1] : memref<8x32xf32, #tpu.memory_space<vmem>>, vector<8x32xf32>
    %c0_2 = arith.constant 0 : index
    %c0_3 = arith.constant 0 : index
    %c0_4 = arith.constant 0 : index
    %4 = vector.load %arg6[%c0_2, %c0_3, %c0_4] : memref<1x128x32xf32, #tpu.memory_space<vmem>>, vector<1x128x32xf32>
    %5 = vector.shape_cast %4 : vector<1x128x32xf32> to vector<128x32xf32>
    %cst = arith.constant dense<0.000000e+00> : vector<8x128xf32>
    %6 = tpu.matmul %3, %5, %cst {dimension_numbers = #tpu.dot_dimension_numbers<[1], [1], [0], [0], [0, 0, 1, 0], [], []>} : vector<8x32xf32>, vector<128x32xf32>, vector<8x128xf32> -> vector<8x128xf32>
    %c0_5 = arith.constant 0 : index
    %c0_6 = arith.constant 0 : index
    %c0_7 = arith.constant 0 : index
    %c0_8 = arith.constant 0 : index
    %7 = vector.load %arg7[%c0_5, %c0_6, %c0_7, %c0_8] : memref<1x1x8x128xf32, #tpu.memory_space<vmem>>, vector<1x1x8x128xf32>
    %8 = vector.shape_cast %7 : vector<1x1x8x128xf32> to vector<8x128xf32>
    %9 = vector.shape_cast %6 : vector<8x128xf32> to vector<1x1x8x128xf32>
    tpu.vector_store %arg7[%c0_5, %c0_6, %c0_7, %c0_8], %9 {strides = array<i32>} : memref<1x1x8x128xf32, #tpu.memory_space<vmem>>, vector<1x1x8x128xf32>,
    return
  }
  func.func @transform_0(%arg0: i32, %arg1: i32, %arg2: i32, %arg3: i32) -> (i32, i32, i32) {
    %c0_i32 = arith.constant 0 : i32
    %c0_i32_0 = arith.constant 0 : i32
    return %arg1, %arg2, %c0_i32 : i32, i32, i32
  }
  func.func @transform_1(%arg0: i32, %arg1: i32, %arg2: i32, %arg3: i32) -> (i32, i32, i32) {
    %c0_i32 = arith.constant 0 : i32
    %c0_i32_0 = arith.constant 0 : i32
    %c0_i32_1 = arith.constant 0 : i32
    return %arg0, %c0_i32, %c0_i32_0 : i32, i32, i32
  }
  func.func @transform_2(%arg0: i32, %arg1: i32, %arg2: i32, %arg3: i32) -> (i32, i32, i32) {
    %c0_i32 = arith.constant 0 : i32
    %c0_i32_0 = arith.constant 0 : i32
    return %arg1, %arg3, %c0_i32 : i32, i32, i32
  }
  func.func @transform_3(%arg0: i32, %arg1: i32, %arg2: i32, %arg3: i32) -> (i32, i32, i32, i32) {
    %c0_i32 = arith.constant 0 : i32
    return %arg1, %arg0, %arg2, %arg3 : i32, i32, i32, i32
  }
}

</mosaic_0001>

<llo_original>
// kernel: bilinear_matrix_attention.1
$region0: #{bilinear_matrix_attention.1}
  #allocation0 [shape = 'u32[]', space=smem, size = 0x4, offset = 0x4, fixed_abs, tag = 'smem constant byte address 0x4 - core index']
  #allocation1 [shape = 'u32[144,128]{1,0:T(1,128)}', space=vmem, size = 0x12000, scoped, tag = 'internal scratch']
  #allocation2 [shape = 'f32[8,32]{1,0:T(8,128)}', space=vmem, size = 0x1000, scoped, tag = 'scratch operand']
  %s0 = inlined_call_operand.vmem [shape: f32[2,8,32], index: 0, kind: input, shape index: {}]
  %s1 = inlined_call_operand.vmem [shape: f32[1,32,32], index: 1, kind: input, shape index: {}]
  %s2 = inlined_call_operand.vmem [shape: f32[2,128,32], index: 2, kind: input, shape index: {}]
  %s3 = inlined_call_operand.vmem [shape: f32[2,1,8,128], index: 3, kind: output, shape index: {}]
  %s4 = sld [smem:[#allocation0]]
  $region49: #{bilinear_matrix_attention.1} parent=0
    _
  %s6 = ssub.s32 1, %s4
  %s7 = scalar_select 0, %s6, %s4
  loop: start=0, step=1, limit=4
  $region2: #{bilinear_matrix_attention.1} parent=0 // loop_pre_header
    _
  $region3: #{bilinear_matrix_attention.1} parent=0 // loop_header
    %s9 = sphi 0, %s13
    %p10 = scmp.ge.s32.totalorder %s9, 4
    %s16 = sphi 0, %s42
    %s17 = sphi 0, %s38
    %s18 = sphi 0, %s34
    %s19 = sphi 0, %s30
    %s20 = sphi 0, %s16
    %s21 = sphi 0, %s17
    %s22 = sphi 0, %s18
    %s23 = sphi 0, %s19
    %s24 = sphi 0, %s20
    %s25 = sphi 0, %s21
    %s26 = sphi 0, %s22
    %s27 = sphi 0, %s23
    %s47 = sphi 0, %s49
    %s50 = sphi 0, %s47
    %s51 = sphi 0, %s50
    %s67 = sphi 0, %s51
    %s73 = sphi 0, %s75
    %s76 = sphi 0, %s73
    %s77 = sphi 0, %s76
    %s93 = sphi 0, %s77
    %s101 = sphi 0, %s103
    %s104 = sphi 0, %s101
    %s105 = sphi 0, %s104
    %s121 = sphi 0, %s105
    %s133 = sphi 0, %s135
    %s136 = sphi 0, %s133
    %s137 = sphi 0, %s136
    %s153 = sphi 0, %s137
  $region4: #{bilinear_matrix_attention.1} parent=0 // loop_header_branch
    %12 = sbr.rel (%p10) target = $region8
  $region5: #{bilinear_matrix_attention.1} parent=0 // loop_body
    %s14 = ssub.s32 %s9, 1
    %s15 = ssub.s32 %s9, 2
    %s28 = sadd.s32 1, %s19
    %p29 = scmp.ge.s32.totalorder %s28, 1
    %s30 = scalar_select %p29, 0, %s28
    %s31 = sadd.s32 1, %s18
    %s32 = scalar_select %p29, %s31, %s18
    %p33 = scmp.ge.s32.totalorder %s32, 1
    %s34 = scalar_select %p33, 0, %s32
    %s35 = sadd.s32 1, %s17
    %s36 = scalar_select %p33, %s35, %s17
    %p37 = scmp.ge.s32.totalorder %s36, 2
    %s38 = scalar_select %p37, 0, %s36
    %s39 = sadd.s32 1, %s16
    %s40 = scalar_select %p37, %s39, %s16
    %p41 = scmp.ge.s32.totalorder %s40, 1
    %s42 = scalar_select %p41, 0, %s40
    %s43 = ssub.s32 %s17, %s38
    %s44 = ssub.s32 %s18, %s34
    %s45 = sor.u32 %s43, %s44
    %p46 = scmp.eq.s32.totalorder %s45, 0
    %s48 = sadd.s32 %s47, 1
    %s49 = scalar_select %p46, %s47, %s48
    %p52 = pneg %p46
    %p53 = scmp.eq.s32.totalorder %s9, 1
    %p54 = por %p52, %p53
    %p55 = scmp.ne.s32.totalorder %s47, %s50
    %p56 = scmp.eq.s32.totalorder %s9, 0
    %p57 = por %p55, %p56
    %p58 = scmp.ne.s32.totalorder %s47, %s50
    %p59 = scmp.eq.s32.totalorder %s14, 1
    %p60 = por %p58, %p59
    %p61 = scmp.ne.s32.totalorder %s50, %s51
    %p62 = scmp.eq.s32.totalorder %s14, 0
    %p63 = por %p61, %p62
    %p64 = scmp.ne.s32.totalorder %s50, %s51
    %p65 = scmp.eq.s32.totalorder %s15, 1
    %p66 = por %p64, %p65
    %p68 = scmp.ne.s32.totalorder %s51, %s67
    %p69 = scmp.eq.s32.totalorder %s15, 0
    %p70 = por %p68, %p69
    %s71 = ssub.s32 %s16, %s42
    %p72 = scmp.eq.s32.totalorder %s71, 0
    %s74 = sadd.s32 %s73, 1
    %s75 = scalar_select %p72, %s73, %s74
    %p78 = pneg %p72
    %p79 = scmp.eq.s32.totalorder %s9, 1
    %p80 = por %p78, %p79
    %p81 = scmp.ne.s32.totalorder %s73, %s76
    %p82 = scmp.eq.s32.totalorder %s9, 0
    %p83 = por %p81, %p82
    %p84 = scmp.ne.s32.totalorder %s73, %s76
    %p85 = scmp.eq.s32.totalorder %s14, 1
    %p86 = por %p84, %p85
    %p87 = scmp.ne.s32.totalorder %s76, %s77
    %p88 = scmp.eq.s32.totalorder %s14, 0
    %p89 = por %p87, %p88
    %p90 = scmp.ne.s32.totalorder %s76, %s77
    %p91 = scmp.eq.s32.totalorder %s15, 1
    %p92 = por %p90, %p91
    %p94 = scmp.ne.s32.totalorder %s77, %s93
    %p95 = scmp.eq.s32.totalorder %s15, 0
    %p96 = por %p94, %p95
    %s97 = ssub.s32 %s17, %s38
    %s98 = ssub.s32 %s19, %s30
    %s99 = sor.u32 %s97, %s98
    %p100 = scmp.eq.s32.totalorder %s99, 0
    %s102 = sadd.s32 %s101, 1
    %s103 = scalar_select %p100, %s101, %s102
    %p106 = pneg %p100
    %p107 = scmp.eq.s32.totalorder %s9, 1
    %p108 = por %p106, %p107
    %p109 = scmp.ne.s32.totalorder %s101, %s104
    %p110 = scmp.eq.s32.totalorder %s9, 0
    %p111 = por %p109, %p110
    %p112 = scmp.ne.s32.totalorder %s101, %s104
    %p113 = scmp.eq.s32.totalorder %s14, 1
    %p114 = por %p112, %p113
    %p115 = scmp.ne.s32.totalorder %s104, %s105
    %p116 = scmp.eq.s32.totalorder %s14, 0
    %p117 = por %p115, %p116
    %p118 = scmp.ne.s32.totalorder %s104, %s105
    %p119 = scmp.eq.s32.totalorder %s15, 1
    %p120 = por %p118, %p119
    %p122 = scmp.ne.s32.totalorder %s105, %s121
    %p123 = scmp.eq.s32.totalorder %s15, 0
    %p124 = por %p122, %p123
    %s125 = ssub.s32 %s17, %s38
    %s126 = ssub.s32 %s16, %s42
    %s127 = sor.u32 %s125, %s126
    %s128 = ssub.s32 %s18, %s34
    %s129 = sor.u32 %s127, %s128
    %s130 = ssub.s32 %s19, %s30
    %s131 = sor.u32 %s129, %s130
    %p132 = scmp.eq.s32.totalorder %s131, 0
    %s134 = sadd.s32 %s133, 1
    %s135 = scalar_select %p132, %s133, %s134
    %p138 = pneg %p132
    %p139 = scmp.eq.s32.totalorder %s9, 1
    %p140 = por %p138, %p139
    %p141 = scmp.ne.s32.totalorder %s133, %s136
    %p142 = scmp.eq.s32.totalorder %s9, 0
    %p143 = por %p141, %p142
    %p144 = scmp.ne.s32.totalorder %s133, %s136
    %p145 = scmp.eq.s32.totalorder %s14, 1
    %p146 = por %p144, %p145
    %p147 = scmp.ne.s32.totalorder %s136, %s137
    %p148 = scmp.eq.s32.totalorder %s14, 0
    %p149 = por %p147, %p148
    %p150 = scmp.ne.s32.totalorder %s136, %s137
    %p151 = scmp.eq.s32.totalorder %s15, 1
    %p152 = por %p150, %p151
    %p154 = scmp.ne.s32.totalorder %s137, %s153
    %p155 = scmp.eq.s32.totalorder %s15, 0
    %p156 = por %p154, %p155
    %p157 = scmp.le.s32.totalorder 1, %s9
    %p158 = scmp.lt.s32.totalorder %s9, 3
    %p159 = pnand %p157, %p158
    %p160 = pneg %p159
    // Predicated region
    $region9: #{bilinear_matrix_attention.1} parent=5 // pred_check
      _
    $region10: #{bilinear_matrix_attention.1} parent=5 // pred_check_branch
      %162 = sbr.rel (%p159) target = $region12
    $region11: #{bilinear_matrix_attention.1} parent=5 // pred_region
      %s163 = ssub.s32 %s9, 1
      // Predicated region
      $region13: #{bilinear_matrix_attention.1} parent=11 // pred_check
        %p164 = pneg %p89
      $region14: #{bilinear_matrix_attention.1} parent=11 // pred_check_branch
        %166 = sbr.rel (%p164) target = $region16
      $region15: #{bilinear_matrix_attention.1} parent=11 // pred_region
        %p167 = scmp.lt.s32.totalorder %s20, 0
        %s168 = scalar_select %p167, %s20, 0
        %s169 = smul.addr %s168, 4
        %s170 = smul.addr %s169, 8
        %s171 = scalar_lea.vmem %s1, %s170
      $region16: #{bilinear_matrix_attention.1} parent=11 // pred_fallthru
        _
    $region12: #{bilinear_matrix_attention.1} parent=5 // pred_fallthru
      _
    %p172 = scmp.lt.s32.totalorder %s9, 2
    // Predicated region
    $region17: #{bilinear_matrix_attention.1} parent=5 // pred_check
      %p173 = pneg %p172
    $region18: #{bilinear_matrix_attention.1} parent=5 // pred_check_branch
      %175 = sbr.rel (%p173) target = $region20
    $region19: #{bilinear_matrix_attention.1} parent=5 // pred_region
      // Predicated region
      $region21: #{bilinear_matrix_attention.1} parent=19 // pred_check
        %p176 = pneg %p57
      $region22: #{bilinear_matrix_attention.1} parent=19 // pred_check_branch
        %178 = sbr.rel (%p176) target = $region24
      $region23: #{bilinear_matrix_attention.1} parent=19 // pred_region
        %p179 = scmp.lt.s32.totalorder %s17, 1
        %s180 = scalar_select %p179, %s17, 1
        %p181 = scmp.lt.s32.totalorder %s18, 0
        %s182 = scalar_select %p181, %s18, 0
        %s183 = sadd.s32 %s182, %s180
        %s184 = smul.addr %s183, 8
        %s185 = scalar_lea.vmem %s0, %s184
      $region24: #{bilinear_matrix_attention.1} parent=19 // pred_fallthru
        _
      // Predicated region
      $region25: #{bilinear_matrix_attention.1} parent=19 // pred_check
        %p186 = pneg %p111
      $region26: #{bilinear_matrix_attention.1} parent=19 // pred_check_branch
        %188 = sbr.rel (%p186) target = $region28
      $region27: #{bilinear_matrix_attention.1} parent=19 // pred_region
        %s189 = smul.u32 16, %s19
        %p190 = scmp.lt.s32.totalorder %s17, 1
        %s191 = scalar_select %p190, %s17, 1
        %p192 = scmp.lt.s32.totalorder %s189, 15
        %s193 = scalar_select %p192, %s189, 15
        %s194 = smul.addr %s191, 16
        %s195 = sadd.s32 %s193, %s194
        %s196 = smul.addr %s195, 8
        %s197 = scalar_lea.vmem %s2, %s196
        %s198 = smul.u32 16, %s19
      $region28: #{bilinear_matrix_attention.1} parent=19 // pred_fallthru
        _
    $region20: #{bilinear_matrix_attention.1} parent=5 // pred_fallthru
      _
    %p199 = scmp.le.s32.totalorder 1, %s9
    %p200 = scmp.lt.s32.totalorder %s9, 3
    %p201 = pnand %p199, %p200
    %p202 = pneg %p201
    // Predicated region
    $region29: #{bilinear_matrix_attention.1} parent=5 // pred_check
      _
    $region30: #{bilinear_matrix_attention.1} parent=5 // pred_check_branch
      %204 = sbr.rel (%p201) target = $region32
    $region31: #{bilinear_matrix_attention.1} parent=5 // pred_region
      %s205 = ssub.s32 %s9, 1
      %p206 = scmp.lt.s32.totalorder %s21, 1
      %s207 = scalar_select %p206, %s21, 1
      %p208 = scmp.lt.s32.totalorder %s22, 0
      %s209 = scalar_select %p208, %s22, 0
      %s210 = sadd.s32 %s209, %s207
      %s211 = smul.addr %s210, 8
      %s212 = scalar_lea.vmem %s0, %s211
      %p213 = pneg %p63
      %p214 = pneg %p60
      %p215 = scmp.lt.s32.totalorder %s20, 0
      %s216 = scalar_select %p215, %s20, 0
      %s217 = smul.addr %s216, 4
      %s218 = smul.addr %s217, 8
      %s219 = scalar_lea.vmem %s1, %s218
      %p220 = pneg %p89
      %p221 = pneg %p86
      %s222 = smul.u32 16, %s23
      %p223 = scmp.lt.s32.totalorder %s21, 1
      %s224 = scalar_select %p223, %s21, 1
      %p225 = scmp.lt.s32.totalorder %s222, 15
      %s226 = scalar_select %p225, %s222, 15
      %s227 = smul.addr %s224, 16
      %s228 = sadd.s32 %s226, %s227
      %s229 = smul.addr %s228, 8
      %s230 = scalar_lea.vmem %s2, %s229
      %p231 = pneg %p117
      %p232 = pneg %p114
      %p233 = pneg %p149
      %p234 = pneg %p146
      %p235 = scmp.lt.s32.totalorder %s21, 1
      %s236 = scalar_select %p235, %s21, 1
      %p237 = scmp.lt.s32.totalorder %s20, 0
      %s238 = scalar_select %p237, %s20, 0
      %p239 = scmp.lt.s32.totalorder %s22, 0
      %s240 = scalar_select %p239, %s22, 0
      %p241 = scmp.lt.s32.totalorder %s23, 0
      %s242 = scalar_select %p241, %s23, 0
      %s243 = sadd.s32 %s242, %s240
      %s244 = sadd.s32 %s243, %s238
      %s245 = sadd.s32 %s244, %s236
      %s246 = smul.addr %s245, 8
      %s247 = scalar_lea.vmem %s3, %s246
      %p248 = scmp.lt.s32.totalorder %s21, 1
      %s249 = scalar_select %p248, %s21, 1
      %p250 = scmp.lt.s32.totalorder %s22, 0
      %s251 = scalar_select %p250, %s22, 0
      %s252 = sadd.s32 %s251, %s249
      %s253 = smul.addr %s252, 8
      %s254 = scalar_lea.vmem %s0, %s253
      %p255 = scmp.lt.s32.totalorder %s20, 0
      %s256 = scalar_select %p255, %s20, 0
      %s257 = smul.addr %s256, 4
      %s258 = smul.addr %s257, 8
      %s259 = scalar_lea.vmem %s1, %s258
      %s260 = smul.u32 16, %s23
      %p261 = scmp.lt.s32.totalorder %s21, 1
      %s262 = scalar_select %p261, %s21, 1
      %p263 = scmp.lt.s32.totalorder %s260, 15
      %s264 = scalar_select %p263, %s260, 15
      %s265 = smul.addr %s262, 16
      %s266 = sadd.s32 %s264, %s265
      %s267 = smul.addr %s266, 8
      %s268 = scalar_lea.vmem %s2, %s267
      %s269 = smul.u32 16, %s23
      %p270 = scmp.lt.s32.totalorder %s21, 1
      %s271 = scalar_select %p270, %s21, 1
      %p272 = scmp.lt.s32.totalorder %s20, 0
      %s273 = scalar_select %p272, %s20, 0
      %p274 = scmp.lt.s32.totalorder %s22, 0
      %s275 = scalar_select %p274, %s22, 0
      %p276 = scmp.lt.s32.totalorder %s23, 0
      %s277 = scalar_select %p276, %s23, 0
      %s278 = sadd.s32 %s277, %s275
      %s279 = sadd.s32 %s278, %s273
      %s280 = sadd.s32 %s279, %s271
      %s281 = smul.addr %s280, 8
      %s282 = scalar_lea.vmem %s3, %s281
      %p283 = scmp.eq.s32.totalorder %s23, 0
      // Predicated region
      $region33: #{bilinear_matrix_attention.1} parent=31 // pred_check
        %p284 = pneg %p283
      $region34: #{bilinear_matrix_attention.1} parent=31 // pred_check_branch
        %286 = sbr.rel (%p284) target = $region36
      $region35: #{bilinear_matrix_attention.1} parent=31 // pred_region
        %v287 = vld [vmem:[%s254] sm:$0xff]
        %v288 = vld [vmem:[%s259] sm:$0xff]
        %v289 = vld [vmem:[%s259 + $0x8] sm:$0xff]
        %v290 = vld [vmem:[%s259 + $0x10] sm:$0xff]
        %v291 = vld [vmem:[%s259 + $0x18] sm:$0xff]
        %vm292 = vcmask 261120
        %v294 = vsel %vm292, %v287, 0
        %296 = vmatprep.subr.mxu0 0.0
        %297 = vmatpush1.msra.mxu0 %v288
        %298 = vmatprep.subr.mxu0 0.0
        %299 = vmatpush1.msra.mxu0 %v289
        %300 = vmatprep.subr.mxu0 0.0
        %301 = vmatpush1.msra.mxu0 %v290
        %302 = vmatprep.subr.mxu0 0.0
        %303 = vmatpush1.msra.mxu0 %v291
        %304 = vmatprep.subr.mxu0 0.0
        %305 = vmatpush1.msra.mxu0 0.0
        %306 = vmatprep.subr.mxu0 0.0
        %307 = vmatpush1.msra.mxu0 0.0
        %308 = vmatprep.subr.mxu0 0.0
        %309 = vmatpush1.msra.mxu0 0.0
        %310 = vmatprep.subr.mxu0 0.0
        %311 = vmatpush1.msra.mxu0 0.0
        %312 = vmatprep.subr.mxu0 0.0
        %313 = vmatpush1.msra.mxu0 0.0
        %314 = vmatprep.subr.mxu0 0.0
        %315 = vmatpush1.msra.mxu0 0.0
        %316 = vmatprep.subr.mxu0 0.0
        %317 = vmatpush1.msra.mxu0 0.0
        %318 = vmatprep.subr.mxu0 0.0
        %319 = vmatpush1.msra.mxu0 0.0
        %320 = vmatprep.subr.mxu0 0.0
        %321 = vmatpush1.msra.mxu0 0.0
        %322 = vmatprep.subr.mxu0 0.0
        %323 = vmatpush1.msra.mxu0 0.0
        %324 = vmatprep.subr.mxu0 0.0
        %325 = vmatpush1.msra.mxu0 0.0
        %326 = vmatprep.subr.mxu0 0.0
        %327 = vmatpush1.msra.mxu0 0.0
        %328 = vmatprep.subr.mxu0 0.0
        %329 = vmatpush1.msra.mxu0 0.0
        %330 = vmatprep.subr.mxu0 0.0
        %331 = vmatpush1.msra.mxu0 0.0
        %332 = vmatprep.subr.mxu0 0.0
        %333 = vmatpush1.msra.mxu0 0.0
        %334 = vmatprep.subr.mxu0 0.0
        %335 = vmatpush1.msra.mxu0 0.0
        %336 = vmatprep.subr.mxu0 0.0
        %337 = vmatpush1.msra.mxu0 0.0
        %338 = vmatprep.subr.mxu0 0.0
        %339 = vmatpush1.msra.mxu0 0.0
        %340 = vmatprep.subr.mxu0 0.0
        %341 = vmatpush1.msra.mxu0 0.0
        %342 = vmatprep.subr.mxu0 0.0
        %343 = vmatpush1.msra.mxu0 0.0
        %344 = vmatprep.subr.mxu0 0.0
        %345 = vmatpush1.msra.mxu0 0.0
        %346 = vmatprep.subr.mxu0 0.0
        %347 = vmatpush1.msra.mxu0 0.0
        %348 = vmatprep.subr.mxu0 0.0
        %349 = vmatpush1.msra.mxu0 0.0
        %350 = vmatprep.subr.mxu0 0.0
        %351 = vmatpush1.msra.mxu0 0.0
        %352 = vmatprep.subr.mxu0 0.0
        %353 = vmatpush1.msra.mxu0 0.0
        %354 = vmatprep.subr.mxu0 0.0
        %355 = vmatpush1.msra.mxu0 0.0
        %356 = vmatprep.subr.mxu0 0.0
        %357 = vmatpush1.msra.mxu0 0.0
        %358 = vmatprep.subr.mxu0 0.0
        %359 = vmatpush1.msra.mxu0 0.0
        %360 = vmatprep.mubr.f32.mxu0 0.0
        %361 = vmatmul.mubr.f32.gmra.mrb[0].mxu0 %v294
        %v362 = vpop.f32.mrb[0].mxu0
        %v363 = vadd.f32 0.0, %v362
        %v364 = vpop.f32.mrb[0].mxu0
        %365 = vdwg.mxu0
        %366 = vst.msk [vmem:[#allocation2] sm:$0xff] %vm292, %v363
      $region36: #{bilinear_matrix_attention.1} parent=31 // pred_fallthru
        _
      %v367 = vld [vmem:[#allocation2] sm:$0xff]
      %v368 = vld [vmem:[%s268] sm:$0xff]
      %v369 = vld [vmem:[%s268 + $0x8] sm:$0xff]
      %v370 = vld [vmem:[%s268 + $0x10] sm:$0xff]
      %v371 = vld [vmem:[%s268 + $0x18] sm:$0xff]
      %v372 = vld [vmem:[%s268 + $0x20] sm:$0xff]
      %v373 = vld [vmem:[%s268 + $0x28] sm:$0xff]
      %v374 = vld [vmem:[%s268 + $0x30] sm:$0xff]
      %v375 = vld [vmem:[%s268 + $0x38] sm:$0xff]
      %v376 = vld [vmem:[%s268 + $0x40] sm:$0xff]
      %v377 = vld [vmem:[%s268 + $0x48] sm:$0xff]
      %v378 = vld [vmem:[%s268 + $0x50] sm:$0xff]
      %v379 = vld [vmem:[%s268 + $0x58] sm:$0xff]
      %v380 = vld [vmem:[%s268 + $0x60] sm:$0xff]
      %v381 = vld [vmem:[%s268 + $0x68] sm:$0xff]
      %v382 = vld [vmem:[%s268 + $0x70] sm:$0xff]
      %v383 = vld [vmem:[%s268 + $0x78] sm:$0xff]
      %vm384 = vcmask 261120
      %v386 = vsel %vm384, %v367, 0
      %v389 = vsel %vm384, %v368, 0
      %v392 = vsel %vm384, %v369, 0
      %v395 = vsel %vm384, %v370, 0
      %v398 = vsel %vm384, %v371, 0
      %v401 = vsel %vm384, %v372, 0
      %v404 = vsel %vm384, %v373, 0
      %v407 = vsel %vm384, %v374, 0
      %v410 = vsel %vm384, %v375, 0
      %v413 = vsel %vm384, %v376, 0
      %v416 = vsel %vm384, %v377, 0
      %v419 = vsel %vm384, %v378, 0
      %v422 = vsel %vm384, %v379, 0
      %v425 = vsel %vm384, %v380, 0
      %v428 = vsel %vm384, %v381, 0
      %v431 = vsel %vm384, %v382, 0
      %v434 = vsel %vm384, %v383, 0
      %436 = vmatprep.subr.mxu0 0.0
      %437 = vmatpush1.xpose.msra.mxu0 %v389
      %438 = vmatprep.subr.mxu0 0.0
      %439 = vmatpush1.xpose.msra.mxu0 %v392
      %440 = vmatprep.subr.mxu0 0.0
      %441 = vmatpush1.xpose.msra.mxu0 %v395
      %442 = vmatprep.subr.mxu0 0.0
      %443 = vmatpush1.xpose.msra.mxu0 %v398
      %444 = vmatprep.subr.mxu0 0.0
      %445 = vmatpush1.xpose.msra.mxu0 %v401
      %446 = vmatprep.subr.mxu0 0.0
      %447 = vmatpush1.xpose.msra.mxu0 %v404
      %448 = vmatprep.subr.mxu0 0.0
      %449 = vmatpush1.xpose.msra.mxu0 %v407
      %450 = vmatprep.subr.mxu0 0.0
      %451 = vmatpush1.xpose.msra.mxu0 %v410
      %452 = vmatprep.subr.mxu0 0.0
      %453 = vmatpush1.xpose.msra.mxu0 %v413
      %454 = vmatprep.subr.mxu0 0.0
      %455 = vmatpush1.xpose.msra.mxu0 %v416
      %456 = vmatprep.subr.mxu0 0.0
      %457 = vmatpush1.xpose.msra.mxu0 %v419
      %458 = vmatprep.subr.mxu0 0.0
      %459 = vmatpush1.xpose.msra.mxu0 %v422
      %460 = vmatprep.subr.mxu0 0.0
      %461 = vmatpush1.xpose.msra.mxu0 %v425
      %462 = vmatprep.subr.mxu0 0.0
      %463 = vmatpush1.xpose.msra.mxu0 %v428
      %464 = vmatprep.subr.mxu0 0.0
      %465 = vmatpush1.xpose.msra.mxu0 %v431
      %466 = vmatprep.subr.mxu0 0.0
      %467 = vmatpush1.xpose.msra.mxu0 %v434
      %468 = vmatprep.subr.mxu0 0.0
      %469 = vmatpush1.xpose.msra.mxu0 0.0
      %470 = vmatprep.subr.mxu0 0.0
      %471 = vmatpush1.xpose.msra.mxu0 0.0
      %472 = vmatprep.subr.mxu0 0.0
      %473 = vmatpush1.xpose.msra.mxu0 0.0
      %474 = vmatprep.subr.mxu0 0.0
      %475 = vmatpush1.xpose.msra.mxu0 0.0
      %476 = vmatprep.subr.mxu0 0.0
      %477 = vmatpush1.xpose.msra.mxu0 0.0
      %478 = vmatprep.subr.mxu0 0.0
      %479 = vmatpush1.xpose.msra.mxu0 0.0
      %480 = vmatprep.subr.mxu0 0.0
      %481 = vmatpush1.xpose.msra.mxu0 0.0
      %482 = vmatprep.subr.mxu0 0.0
      %483 = vmatpush1.xpose.msra.mxu0 0.0
      %484 = vmatprep.subr.mxu0 0.0
      %485 = vmatpush1.xpose.msra.mxu0 0.0
      %486 = vmatprep.subr.mxu0 0.0
      %487 = vmatpush1.xpose.msra.mxu0 0.0
      %488 = vmatprep.subr.mxu0 0.0
      %489 = vmatpush1.xpose.msra.mxu0 0.0
      %490 = vmatprep.subr.mxu0 0.0
      %491 = vmatpush1.xpose.msra.mxu0 0.0
      %492 = vmatprep.subr.mxu0 0.0
      %493 = vmatpush1.xpose.msra.mxu0 0.0
      %494 = vmatprep.subr.mxu0 0.0
      %495 = vmatpush1.xpose.msra.mxu0 0.0
      %496 = vmatprep.subr.mxu0 0.0
      %497 = vmatpush1.xpose.msra.mxu0 0.0
      %498 = vmatprep.subr.mxu0 0.0
      %499 = vmatpush1.xpose.msra.mxu0 0.0
      %500 = vmatprep.mubr.f32.mxu0 0.0
      %501 = vmatmul.mubr.f32.gmra.mrb[0].mxu0 %v386
      %v502 = vpop.f32.mrb[0].mxu0
      %v503 = vadd.f32 0.0, %v502
      %v504 = vpop.f32.mrb[0].mxu0
      %505 = vdwg.mxu0
      %506 = vst [vmem:[%s282] sm:$0xff] %v503
      %p507 = scmp.lt.s32.totalorder %s21, 1
      %s508 = scalar_select %p507, %s21, 1
      %p509 = scmp.lt.s32.totalorder %s20, 0
      %s510 = scalar_select %p509, %s20, 0
      %p511 = scmp.lt.s32.totalorder %s22, 0
      %s512 = scalar_select %p511, %s22, 0
      %p513 = scmp.lt.s32.totalorder %s23, 0
      %s514 = scalar_select %p513, %s23, 0
      %s515 = sadd.s32 %s514, %s512
      %s516 = sadd.s32 %s515, %s510
      %s517 = sadd.s32 %s516, %s508
      %s518 = smul.addr %s517, 8
      %s519 = scalar_lea.vmem %s3, %s518
      // Predicated region
      $region37: #{bilinear_matrix_attention.1} parent=31 // pred_check
        %p520 = pneg %p146
      $region38: #{bilinear_matrix_attention.1} parent=31 // pred_check_branch
        %522 = sbr.rel (%p520) target = $region40
      $region39: #{bilinear_matrix_attention.1} parent=31 // pred_region
        _
      $region40: #{bilinear_matrix_attention.1} parent=31 // pred_fallthru
        _
    $region32: #{bilinear_matrix_attention.1} parent=5 // pred_fallthru
      _
    %p523 = scmp.le.s32.totalorder 2, %s9
    // Predicated region
    $region41: #{bilinear_matrix_attention.1} parent=5 // pred_check
      %p524 = pneg %p523
    $region42: #{bilinear_matrix_attention.1} parent=5 // pred_check_branch
      %526 = sbr.rel (%p524) target = $region44
    $region43: #{bilinear_matrix_attention.1} parent=5 // pred_region
      %s527 = ssub.s32 %s9, 2
      // Predicated region
      $region45: #{bilinear_matrix_attention.1} parent=43 // pred_check
        %p528 = pneg %p152
      $region46: #{bilinear_matrix_attention.1} parent=43 // pred_check_branch
        %530 = sbr.rel (%p528) target = $region48
      $region47: #{bilinear_matrix_attention.1} parent=43 // pred_region
        %p531 = scmp.lt.s32.totalorder %s25, 1
        %s532 = scalar_select %p531, %s25, 1
        %p533 = scmp.lt.s32.totalorder %s24, 0
        %s534 = scalar_select %p533, %s24, 0
        %p535 = scmp.lt.s32.totalorder %s26, 0
        %s536 = scalar_select %p535, %s26, 0
        %p537 = scmp.lt.s32.totalorder %s27, 0
        %s538 = scalar_select %p537, %s27, 0
        %s539 = sadd.s32 %s538, %s536
        %s540 = sadd.s32 %s539, %s534
        %s541 = sadd.s32 %s540, %s532
        %s542 = smul.addr %s541, 8
        %s543 = scalar_lea.vmem %s3, %s542
      $region48: #{bilinear_matrix_attention.1} parent=43 // pred_fallthru
        _
    $region44: #{bilinear_matrix_attention.1} parent=5 // pred_fallthru
      _
  $region6: #{bilinear_matrix_attention.1} parent=0 // loop_footer
    %s13 = sadd.s32 1, %s9
  $region7: #{bilinear_matrix_attention.1} parent=0 // loop_footer_branch
    %8 = sbr.rel target = $region3
  $region8: #{bilinear_matrix_attention.1} parent=0 // loop_exit
    _

</llo_original>
